<compile_context>
chip_gen: v5e
topology: v5e:2x2
jax: 0.10.0
libtpu: 0.0.40
codegen_flags: <defaults>
</compile_context>

<pallas_src>
import functools
import math

import numpy as np
import jax
import jax.numpy as jnp
from jax.experimental import pallas as pl
from jax.experimental.pallas import tpu as pltpu


# ----------------------------- host-side helpers -----------------------------
def _is_seq(x):
    return isinstance(x, (list, tuple, np.ndarray))


def _cdiv(a, b):
    return -(-a // b)


def _roundup(a, b):
    return _cdiv(a, b) * b


def _generate_anchors_np(scales, aspect_ratios, spatial_dims):
    """Numpy port of AnchorGenerator.generate_anchors (f32, round-half-to-even)."""
    scales_t = np.asarray(scales, dtype=np.float32)
    ar_t = np.asarray(aspect_ratios, dtype=np.float32)
    if spatial_dims == 2:
        area_scale = np.sqrt(ar_t)
        w_ratios = 1.0 / area_scale
        h_ratios = area_scale
        ws = (w_ratios[:, None] * scales_t[None, :]).reshape(-1)
        hs = (h_ratios[:, None] * scales_t[None, :]).reshape(-1)
        base = np.stack([-ws, -hs, ws, hs], axis=1) / 2.0
    elif spatial_dims == 3:
        area_scale = np.power(ar_t[:, 0] * ar_t[:, 1], 1.0 / 3.0)
        w_ratios = 1.0 / area_scale
        h_ratios = ar_t[:, 0] / area_scale
        d_ratios = ar_t[:, 1] / area_scale
        ws = (w_ratios[:, None] * scales_t[None, :]).reshape(-1)
        hs = (h_ratios[:, None] * scales_t[None, :]).reshape(-1)
        ds = (d_ratios[:, None] * scales_t[None, :]).reshape(-1)
        base = np.stack([-ws, -hs, -ds, ws, hs, ds], axis=1) / 2.0
    else:
        raise ValueError("spatial_dims must be 2 or 3")
    # torch.round == round-half-to-even == np.round
    return np.round(base).astype(np.float32)


def _axis_slot(axis, spatial_dims, indexing):
    """Coordinate slot (mod spatial_dims) that carries grid-axis `axis` centers."""
    if indexing == "xy" and axis < 2:
        return 1 - axis
    return axis


def _grid_anchors_np(grid_size, stride, base, spatial_dims, indexing):
    """Numpy reference of MONAI AnchorGenerator.grid_anchors for one level."""
    centers = [np.arange(grid_size[ax], dtype=np.int64) * stride[ax] for ax in range(spatial_dims)]
    mesh = [m.reshape(-1) for m in np.meshgrid(*centers, indexing="ij")]
    if indexing == "xy":
        mesh[1], mesh[0] = mesh[0], mesh[1]
    shifts = np.stack(mesh * 2, axis=1).astype(np.float32)
    return (shifts[:, None, :] + base[None, :, :]).reshape(-1, 2 * spatial_dims)


def _choose_units_per_block(num_units, elems_per_unit, max_bytes):
    """Pick units-per-block u with u*elems_per_unit % 128 == 0 (lane-dense blocks),
    favouring exact divisors of num_units (no padding) and the largest block that
    fits the soft byte budget.  Returns (u, umin)."""
    umin = 128 // math.gcd(elems_per_unit, 128)
    unit_bytes = 4 * elems_per_unit
    budget = max(umin, (max_bytes // (unit_bytes * umin)) * umin)
    umax = max(umin, min(budget, _roundup(num_units, umin)))
    best = None
    u = umin
    while u <= umax:
        if num_units % u == 0:
            best = u
        u += umin
    return (best if best is not None else umax), umin


# --------------------------------- kernels -----------------------------------
def _fast_level_kernel(pattern_ref, mask_ref, out_ref, *, block_shift):
    # Block is aligned to whole axis-0 slabs: everything except the axis-0 base
    # offset is a host-precomputed constant -> 1 mul + 1 add per element.
    t = pl.program_id(0)
    off = (t * block_shift).astype(jnp.float32)
    out_ref[0] = pattern_ref[...] + off * mask_ref[...]


def _general_level_kernel(nloc_ref, smask_ref, anchor_ref, out_ref, *,
                          positions_per_block, grid_size):
    # Fallback: blocks are arbitrary position ranges; decompose the global
    # position index with constant-divisor div/mod (strength-reduced) and sum
    # per-axis contributions through host-precomputed stride masks.
    sd = len(grid_size)
    t = pl.program_id(0)
    n = nloc_ref[...] + t * positions_per_block          # (R, 128) int32
    if sd == 2:
        g1 = grid_size[1]
        q1 = n // g1
        idx = [q1, n - q1 * g1]
    else:
        g1, g2 = grid_size[1], grid_size[2]
        q2 = n // g2
        i2 = n - q2 * g2
        q1 = q2 // g1
        i1 = q2 - q1 * g1
        idx = [q1, i1, i2]
    shift = idx[0] * smask_ref[0]
    for ax in range(1, sd):
        shift = shift + idx[ax] * smask_ref[ax]
    out_ref[0] = shift.astype(jnp.float32) + anchor_ref[...]


# ----------------------------- AnchorGenerator --------------------------------
class AnchorGeneratorPallas:
    """Pallas/TPU implementation of monai AnchorGenerator forward semantics."""

    def __init__(self, sizes=((20, 30, 40),), aspect_ratios=(((0.5, 1), (1, 0.5)),),
                 indexing="ij", max_tile_bytes=2 * 1024 * 1024):
        if not _is_seq(sizes[0]):
            self.sizes = tuple((s,) for s in sizes)
        else:
            self.sizes = tuple(tuple(s) for s in sizes)
        if not _is_seq(aspect_ratios[0]):
            aspect_ratios = (aspect_ratios,) * len(self.sizes)
        if len(self.sizes) != len(aspect_ratios):
            raise ValueError("len(sizes) and len(aspect_ratios) should be equal.")
        first_ar = aspect_ratios[0][0]
        self.spatial_dims = (len(first_ar) if _is_seq(first_ar) else 1) + 1
        if self.spatial_dims not in (2, 3):
            raise ValueError("spatial_dims must be 2 or 3")
        if indexing not in ("ij", "xy"):
            raise ValueError("indexing must be 'ij' or 'xy'")
        self.indexing = indexing
        self.aspect_ratios = aspect_ratios
        self.max_tile_bytes = int(max_tile_bytes)
        self.cell_anchors = [
            _generate_anchors_np(size, ar, self.spatial_dims)
            for size, ar in zip(self.sizes, aspect_ratios)
        ]
        self.last_level_paths = []   # "fast" / "general" per level of the last call

    def num_anchors_per_location(self):
        return [c.shape[0] for c in self.cell_anchors]

    # ----------------- Pallas hot path: per-level grid anchors -----------------
    def _grid_anchors_level(self, level_idx, grid_size, stride):
        sd = self.spatial_dims
        base = self.cell_anchors[level_idx]                  # (A, 2*sd) float32
        A = int(base.shape[0])
        out_w = 2 * sd * A                                   # elems per position
        grid_size = tuple(int(g) for g in grid_size)
        stride = tuple(int(s) for s in stride)
        N = int(np.prod(grid_size))
        E = N * out_w
        tail0 = int(np.prod(grid_size[1:]))                  # positions per axis-0 slab
        slab_elems = tail0 * out_w
        max_bytes = self.max_tile_bytes
        parallel = pltpu.CompilerParams(dimension_semantics=("parallel",))

        K, kmin = _choose_units_per_block(grid_size[0], slab_elems, max_bytes)
        use_fast = (kmin * slab_elems * 4) <= max_bytes

        if use_fast:
            # ---- fast path: block = K whole axis-0 slabs, 1 mul + 1 add / elem ----
            num_blocks = _cdiv(grid_size[0], K)
            block_elems = K * slab_elems
            R = block_elems // 128
            sub_grid = (K,) + grid_size[1:]
            pattern = _grid_anchors_np(sub_grid, stride, base, sd, self.indexing)
            pattern = np.ascontiguousarray(pattern, dtype=np.float32).reshape(R, 128)
            slot0 = _axis_slot(0, sd, self.indexing)
            row_mask = (np.arange(2 * sd) % sd == slot0).astype(np.float32)
            mask = np.ascontiguousarray(
                np.broadcast_to(row_mask, (K * tail0 * A, 2 * sd))).reshape(R, 128)
            kernel = functools.partial(_fast_level_kernel, block_shift=K * stride[0])
            out = pl.pallas_call(
                kernel,
                out_shape=jax.ShapeDtypeStruct((num_blocks, R, 128), jnp.float32),
                grid=(num_blocks,),
                in_specs=[pl.BlockSpec((R, 128), lambda t: (0, 0)),
                          pl.BlockSpec((R, 128), lambda t: (0, 0))],
                out_specs=pl.BlockSpec((1, R, 128), lambda t: (t, 0, 0)),
                compiler_params=parallel,
            )(jnp.asarray(pattern), jnp.asarray(mask))
            self.last_level_paths.append("fast")
            n_pad = num_blocks * K * tail0
        else:
            # ---- general path: arbitrary position tiles, const div/mod decompose ----
            TN, _ = _choose_units_per_block(N, out_w, max_bytes)
            num_blocks = _cdiv(N, TN)
            block_elems = TN * out_w
            R = block_elems // 128
            flat_idx = np.arange(block_elems, dtype=np.int64)
            nloc = (flat_idx // out_w).astype(np.int32).reshape(R, 128)
            anchor_flat = np.ascontiguousarray(base, dtype=np.float32).reshape(-1)
            anchor_pat = anchor_flat[flat_idx % out_w].astype(np.float32).reshape(R, 128)
            coord_mod_sd = (flat_idx % out_w) % sd
            smask = np.zeros((sd, R, 128), dtype=np.int32)
            for ax in range(sd):
                slot = _axis_slot(ax, sd, self.indexing)
                smask[ax] = np.where(coord_mod_sd == slot, stride[ax], 0
                                     ).astype(np.int32).reshape(R, 128)
            kernel = functools.partial(_general_level_kernel,
                                       positions_per_block=TN, grid_size=grid_size)
            out = pl.pallas_call(
                kernel,
                out_shape=jax.ShapeDtypeStruct((num_blocks, R, 128), jnp.float32),
                grid=(num_blocks,),
                in_specs=[pl.BlockSpec((R, 128), lambda t: (0, 0)),
                          pl.BlockSpec((sd, R, 128), lambda t: (0, 0, 0)),
                          pl.BlockSpec((R, 128), lambda t: (0, 0))],
                out_specs=pl.BlockSpec((1, R, 128), lambda t: (t, 0, 0)),
                compiler_params=parallel,
            )(jnp.asarray(nloc), jnp.asarray(smask), jnp.asarray(anchor_pat))
            self.last_level_paths.append("general")
            n_pad = num_blocks * TN

        flat = out.reshape(-1)
        if n_pad * out_w != E:
            flat = flat[:E]          # ragged last block: drop padded tail positions
        # row n*A + a  ==  shift[n] + base_anchor[a]   (contiguous, reshape is free)
        return flat.reshape(N * A, 2 * sd)

    # ---------------------------------- forward ---------------------------------
    def __call__(self, images, feature_maps):
        sd = self.spatial_dims
        grid_sizes = [tuple(int(s) for s in fm.shape[-sd:]) for fm in feature_maps]
        image_size = tuple(int(s) for s in images.shape[-sd:])
        batchsize = int(images.shape[0])
        if len(grid_sizes) != len(self.cell_anchors):
            raise ValueError(
                "number of feature maps must match the number of sizes / aspect ratios")
        strides = [tuple(image_size[ax] // g[ax] for ax in range(sd)) for g in grid_sizes]
        self.last_level_paths = []
        levels = [
            self._grid_anchors_level(i, g, s)
            for i, (g, s) in enumerate(zip(grid_sizes, strides))
        ]
        anchors_per_image = levels[0] if len(levels) == 1 else jnp.concatenate(levels, axis=0)
        return [anchors_per_image] * batchsize


# ---------------------------- pure-numpy reference ----------------------------
def _ref_forward(gen: AnchorGeneratorPallas, images, feature_maps):
    sd = gen.spatial_dims
    grid_sizes = [tuple(int(s) for s in fm.shape[-sd:]) for fm in feature_maps]
    image_size = tuple(int(s) for s in images.shape[-sd:])
    strides = [tuple(image_size[ax] // g[ax] for ax in range(sd)) for g in grid_sizes]
    levels = [
        _grid_anchors_np(g, s, base, sd, gen.indexing)
        for g, s, base in zip(grid_sizes, strides, gen.cell_anchors)
    ]
    anchors = np.concatenate(levels, axis=0) if len(levels) > 1 else levels[0]
    return [anchors] * int(images.shape[0])


def _run_case(name, gen, images, feature_maps, expect_paths=None):
    out = gen(images, feature_maps)
    out = [jax.block_until_ready(o) for o in out]
    ref = _ref_forward(gen, images, feature_maps)
    assert len(out) == len(ref) == int(images.shape[0])
    for o, r in zip(out, ref):
        assert o.shape == r.shape, (name, o.shape, r.shape)
        np.testing.assert_allclose(np.asarray(o), r, rtol=0, atol=0, err_msg=name)
    if expect_paths is not None:
        assert gen.last_level_paths == list(expect_paths), (name, gen.last_level_paths)


if __name__ == "__main__":
    key = jax.random.PRNGKey(0)
    keys = jax.random.split(key, 8)

    # ---- Case 1: 2D, 'ij', 2 FPN levels, default tiling (lane-dense fast path). ----
    sizes2d = ((10, 12, 14, 16), (20, 24, 28, 32))
    ar2d = ((1.0, 0.5, 2.0), (1.0, 0.5, 2.0))
    gen1 = AnchorGeneratorPallas(sizes2d, ar2d, indexing="ij")
    images2d = jax.random.normal(keys[0], (2, 4, 16, 16), dtype=jnp.float32)
    fmaps2d = [jax.random.normal(keys[1], (2, 4, 8, 8), dtype=jnp.float32),
               jax.random.normal(keys[2], (2, 4, 4, 4), dtype=jnp.float32)]
    _run_case("2d_ij", gen1, images2d, fmaps2d, expect_paths=("fast", "fast"))

    # ---- Case 2: 2D, 'xy', tiny tile budget -> multi-block fast path over the grid. ----
    gen2 = AnchorGeneratorPallas(sizes2d, ar2d, indexing="xy", max_tile_bytes=4096)
    _run_case("2d_xy_tiled", gen2, images2d, fmaps2d, expect_paths=("fast", "fast"))

    # ---- Case 3: 3D, 'ij', default tiling. ----
    sizes3d = ((8, 10), (16, 20))
    ar3d = (((1.0, 1.0), (1.0, 0.5)), ((1.0, 1.0), (1.0, 0.5)))
    gen3 = AnchorGeneratorPallas(sizes3d, ar3d, indexing="ij")
    images3d = jax.random.normal(keys[3], (2, 1, 16, 16, 16), dtype=jnp.float32)
    fmaps3d = [jax.random.normal(keys[4], (2, 6, 8, 8, 8), dtype=jnp.float32),
               jax.random.normal(keys[5], (2, 6, 4, 4, 4), dtype=jnp.float32)]
    _run_case("3d_ij", gen3, images3d, fmaps3d, expect_paths=("fast", "fast"))

    # ---- Case 4: 3D with a budget small enough that level 0 uses the general
    #      (div/mod) fallback while level 1 stays on the fast path. ----
    gen4 = AnchorGeneratorPallas(sizes3d, ar3d, indexing="ij", max_tile_bytes=4096)
    _run_case("3d_mixed_paths", gen4, images3d, fmaps3d, expect_paths=("general", "fast"))

    # ---- Case 5: ragged grid (5 x 4) -> padded last block + tail slice. ----
    gen5 = AnchorGeneratorPallas((sizes2d[0],), (ar2d[0],), indexing="ij")
    images5 = jax.random.normal(keys[6], (2, 1, 20, 16), dtype=jnp.float32)
    fmaps5 = [jax.random.normal(keys[7], (2, 1, 5, 4), dtype=jnp.float32)]
    _run_case("2d_ragged", gen5, images5, fmaps5, expect_paths=("fast",))

    print("KERNEL_OK")
</pallas_src>

<mosaic_0001>
module attributes {stable_mosaic.version = 11 : i64} {
  func.func @_fast_level_kernel(%arg0: i32, %arg1: memref<24x128xf32, #tpu.memory_space<vmem>>, %arg2: memref<24x128xf32, #tpu.memory_space<vmem>>, %arg3: memref<1x24x128xf32, #tpu.memory_space<vmem>>) attributes {dimension_semantics = [#tpu.dimension_semantics<parallel>], iteration_bounds = array<i64: 1>, scalar_prefetch = 0 : i64, scratch_operands = 0 : i64, tpu.core_type = #tpu.core_type<tc>, window_params = [{pipeline_mode = #tpu.pipeline_mode<synchronous>, transform_indices = @transform_0, window_bounds = array<i64: 24, 128>}, {pipeline_mode = #tpu.pipeline_mode<synchronous>, transform_indices = @transform_1, window_bounds = array<i64: 24, 128>}, {transform_indices = @transform_2, window_bounds = array<i64: 1, 24, 128>}]} {
    %c16_i32 = arith.constant 16 : i32
    %0 = arith.muli %arg0, %c16_i32 : i32
    %1 = arith.sitofp %0 : i32 to f32
    %c0 = arith.constant 0 : index
    %c0_0 = arith.constant 0 : index
    %2 = vector.load %arg1[%c0, %c0_0] : memref<24x128xf32, #tpu.memory_space<vmem>>, vector<24x128xf32>
    %c0_1 = arith.constant 0 : index
    %c0_2 = arith.constant 0 : index
    %3 = vector.load %arg2[%c0_1, %c0_2] : memref<24x128xf32, #tpu.memory_space<vmem>>, vector<24x128xf32>
    %4 = vector.broadcast %1 : f32 to vector<24x128xf32>
    %5 = arith.mulf %4, %3 : vector<24x128xf32>
    %6 = arith.addf %2, %5 : vector<24x128xf32>
    %c0_3 = arith.constant 0 : index
    %c0_4 = arith.constant 0 : index
    %c0_5 = arith.constant 0 : index
    %7 = vector.load %arg3[%c0_3, %c0_4, %c0_5] : memref<1x24x128xf32, #tpu.memory_space<vmem>>, vector<1x24x128xf32>
    %8 = vector.shape_cast %7 : vector<1x24x128xf32> to vector<24x128xf32>
    %9 = vector.shape_cast %6 : vector<24x128xf32> to vector<1x24x128xf32>
    tpu.vector_store %arg3[%c0_3, %c0_4, %c0_5], %9 {strides = array<i32>} : memref<1x24x128xf32, #tpu.memory_space<vmem>>, vector<1x24x128xf32>,
    return
  }
  func.func @transform_0(%arg0: i32) -> (i32, i32) {
    %c0_i32 = arith.constant 0 : i32
    %c0_i32_0 = arith.constant 0 : i32
    %c0_i32_1 = arith.constant 0 : i32
    return %c0_i32, %c0_i32_0 : i32, i32
  }
  func.func @transform_1(%arg0: i32) -> (i32, i32) {
    %c0_i32 = arith.constant 0 : i32
    %c0_i32_0 = arith.constant 0 : i32
    %c0_i32_1 = arith.constant 0 : i32
    return %c0_i32, %c0_i32_0 : i32, i32
  }
  func.func @transform_2(%arg0: i32) -> (i32, i32, i32) {
    %c0_i32 = arith.constant 0 : i32
    %c0_i32_0 = arith.constant 0 : i32
    %c0_i32_1 = arith.constant 0 : i32
    return %arg0, %c0_i32, %c0_i32_0 : i32, i32, i32
  }
}

</mosaic_0001>

<llo_original>
// kernel: tpu_custom_call.1
$region0: #{tpu_custom_call.1}
  #allocation0 [shape = 'u32[]', space=smem, size = 0x4, offset = 0x4, fixed_abs, tag = 'smem constant byte address 0x4 - core index']
  #allocation1 [shape = 'u32[72,128]{1,0:T(1,128)}', space=vmem, size = 0x9000, scoped, tag = 'internal scratch']
  %s0 = inlined_call_operand.hbm [shape: f32[24,128], index: 0, kind: input, shape index: {}]
  %s1 = inlined_call_operand.hbm [shape: f32[24,128], index: 1, kind: input, shape index: {}]
  %s2 = inlined_call_operand.hbm [shape: f32[1,24,128], index: 2, kind: output, shape index: {}]
  %s3 = sld [smem:[#allocation0]]
  $region26: #{tpu_custom_call.1} parent=0
    _
  %s5 = ssub.s32 1, %s3
  %s6 = scalar_select 0, %s5, %s3
  $region1: #{tpu_custom_call.1} parent=0
    #allocation2 [shape = 'u8[12288]{0}', space=vmem, size = 0x3000, scoped, tag = 'input window, operand 0, single buffered']
    #allocation3 [shape = 's32[1]{0}', space=sflag, size = 0x4, scoped, tag = 'scoped memory for tpu_custom_call.1']
    #allocation4 [shape = 's32[1]{0}', space=sflag, size = 0x4, scoped, tag = 'scoped memory for tpu_custom_call.1']
    #allocation5 [shape = 'u8[12288]{0}', space=vmem, size = 0x3000, scoped, tag = 'input window, operand 1, single buffered']
    #allocation6 [shape = 's32[1]{0}', space=sflag, size = 0x4, scoped, tag = 'scoped memory for tpu_custom_call.1']
    #allocation7 [shape = 'u8[12288]{0}', space=vmem, size = 0x3000, scoped, tag = 'output window, operand 0, single buffered']
    %7 = vsyncpa [#allocation3], 0
    %8 = vsyncpa [#allocation6], 0
    %9 = vsyncpa [#allocation4], 0
    // Predicated region
    $region2: #{tpu_custom_call.1} parent=1 // pred_check
      _
    $region3: #{tpu_custom_call.1} parent=1 // pred_check_branch
      %11 = sbr.rel (0) target = $region5
    $region4: #{tpu_custom_call.1} parent=1 // pred_region
      %13 = vsyncadd [#allocation3], 0
      %s14 = sshll.u32 %s0, 4
      %s15 = int_to_ptr.hbm [resolvable:$true] %s14
      %s16 = sshll.u32 [#allocation2], 4
      %s17 = int_to_ptr.vmem [resolvable:$true] %s16
      %22 = dma.hbm_to_vmem [thread:$0]  %s15, 384, %s17, [#allocation3], 128, 128, 8
    $region5: #{tpu_custom_call.1} parent=1 // pred_fallthru
      _
    // Predicated region
    $region6: #{tpu_custom_call.1} parent=1 // pred_check
      _
    $region7: #{tpu_custom_call.1} parent=1 // pred_check_branch
      %24 = sbr.rel (0) target = $region9
    $region8: #{tpu_custom_call.1} parent=1 // pred_region
      %26 = vsyncadd [#allocation6], 0
      %s27 = sshll.u32 %s1, 4
      %s28 = int_to_ptr.hbm [resolvable:$true] %s27
      %s29 = sshll.u32 [#allocation5], 4
      %s30 = int_to_ptr.vmem [resolvable:$true] %s29
      %35 = dma.hbm_to_vmem [thread:$0]  %s28, 384, %s30, [#allocation6], 128, 128, 8
    $region9: #{tpu_custom_call.1} parent=1 // pred_fallthru
      _
    // Predicated region
    $region10: #{tpu_custom_call.1} parent=1 // pred_check
      _
    $region11: #{tpu_custom_call.1} parent=1 // pred_check_branch
      %37 = sbr.rel (0) target = $region13
    $region12: #{tpu_custom_call.1} parent=1 // pred_region
      %39 = dma.done [#allocation3], 384
    $region13: #{tpu_custom_call.1} parent=1 // pred_fallthru
      _
    // Predicated region
    $region14: #{tpu_custom_call.1} parent=1 // pred_check
      _
    $region15: #{tpu_custom_call.1} parent=1 // pred_check_branch
      %41 = sbr.rel (0) target = $region17
    $region16: #{tpu_custom_call.1} parent=1 // pred_region
      %43 = dma.done [#allocation6], 384
    $region17: #{tpu_custom_call.1} parent=1 // pred_fallthru
      _
    %s44 = smul.u32 0, 16
    %s45 = scvt.s32.f32 %s44
    %v46 = vld [vmem:[#allocation2] sm:$0xff]
    %v47 = vld [vmem:[#allocation2 + $0x8] sm:$0xff]
    %v48 = vld [vmem:[#allocation2 + $0x10] sm:$0xff]
    %v49 = vld [vmem:[#allocation5] sm:$0xff]
    %v50 = vld [vmem:[#allocation5 + $0x8] sm:$0xff]
    %v51 = vld [vmem:[#allocation5 + $0x10] sm:$0xff]
    %v52 = vstv %s45
    %v53 = vmul.f32 %v52, %v49
    %v54 = vmul.f32 %v52, %v50
    %v55 = vmul.f32 %v52, %v51
    %v56 = vadd.f32 %v46, %v53
    %v57 = vadd.f32 %v47, %v54
    %v58 = vadd.f32 %v48, %v55
    %59 = vst [vmem:[#allocation7] sm:$0xff] %v56
    %60 = vst [vmem:[#allocation7 + $0x8] sm:$0xff] %v57
    %61 = vst [vmem:[#allocation7 + $0x10] sm:$0xff] %v58
    // Predicated region
    $region18: #{tpu_custom_call.1} parent=1 // pred_check
      _
    $region19: #{tpu_custom_call.1} parent=1 // pred_check_branch
      %63 = sbr.rel (0) target = $region21
    $region20: #{tpu_custom_call.1} parent=1 // pred_region
      %65 = vsyncadd [#allocation4], 0
      %s66 = sshll.u32 [#allocation7], 4
      %s67 = int_to_ptr.vmem [resolvable:$true] %s66
      %s68 = sshll.u32 %s2, 4
      %s69 = int_to_ptr.hbm [resolvable:$true] %s68
      %74 = dma.vmem_to_hbm [thread:$0]  %s67, 384, %s69, [#allocation4], 128, 128, 8
    $region21: #{tpu_custom_call.1} parent=1 // pred_fallthru
      _
    // Predicated region
    $region22: #{tpu_custom_call.1} parent=1 // pred_check
      _
    $region23: #{tpu_custom_call.1} parent=1 // pred_check_branch
      %76 = sbr.rel (0) target = $region25
    $region24: #{tpu_custom_call.1} parent=1 // pred_region
      %78 = dma.done [#allocation4], 384
    $region25: #{tpu_custom_call.1} parent=1 // pred_fallthru
      _
    %79 = vsyncpa [#allocation3], 1
    %80 = vsyncpa [#allocation6], 1
    %81 = vsyncpa [#allocation4], 1

</llo_original>
